<compile_context>
chip_gen: v6e
topology: v6e:2x2x1
jax: 0.10.0
libtpu: 0.0.40
codegen_flags: <defaults>
</compile_context>

<pallas_src>
import jax
import jax.numpy as jnp
from jax.experimental import pallas as pl
from jax.experimental.pallas import tpu as pltpu  # noqa: F401  (TPU backend)
import numpy as np

M, K, N = 2, 2, 2          # x1: (M, K), x2: (K, N), v = x1 @ x2: (M, N)
OUT_ROWS = 7 * M           # 7 row-blocks of height 2 -> 14
OUT_COLS = 3 * N           # widest block (c1) is 3 copies of v -> 6

# ---------------------------------------------------------------------------
# Compile-time constants: selector matrices with the validity mask folded in.
#   out[r, c] = mask[r, c] * v[r % 2, c % 2]
#             = sum_{i,j} v[i, j] * SEL[i*N + j][r, c]
# where SEL[i*N+j][r, c] = mask[r, c] * [r%2 == i] * [c%2 == j]
# Per-row-block valid widths for [c1, c2, v1, v2, v1, c1, c2] -> [6,4,2,2,2,6,4]
# ---------------------------------------------------------------------------
_WIDTHS = np.array([3 * N, 2 * N, N, N, N, 3 * N, 2 * N], dtype=np.int32)
_rr, _cc = np.meshgrid(np.arange(OUT_ROWS), np.arange(OUT_COLS), indexing="ij")
_mask = (_cc < _WIDTHS[_rr // M]).astype(np.float32)
_sel_np = np.zeros((M * N, OUT_ROWS, OUT_COLS), dtype=np.float32)
for _i in range(M):
    for _j in range(N):
        _sel_np[_i * N + _j] = _mask * (_rr % M == _i) * (_cc % N == _j)
_SEL = jnp.asarray(_sel_np)                       # (4, 14, 6) f32 constant


def _model_kernel(x1_ref, x2_ref, sel_ref, o_ref):
    x1 = x1_ref[...]                               # (2, 2)
    x2 = x2_ref[...]                               # (2, 2)

    # v = x1 @ x2 with K=2 done on the VPU (no MXU fill/drain on the crit path):
    #   v = x1[:, 0:1] * x2[0:1, :] + x1[:, 1:2] * x2[1:2, :]
    v = x1[:, 0:1] * x2[0:1, :] + x1[:, 1:2] * x2[1:2, :]   # (2, 2) f32

    # Replicate + mask via baked-in selector constants: 4 vmul + 3 vadd.
    out = (v[0:1, 0:1] * sel_ref[0]
           + v[0:1, 1:2] * sel_ref[1]
           + v[1:2, 0:1] * sel_ref[2]
           + v[1:2, 1:2] * sel_ref[3])                       # (14, 6)

    o_ref[...] = out.astype(o_ref.dtype)


def model_forward(x1, x2):
    # No grid, no index_maps: whole arrays live in VMEM for the single
    # invocation (block shape == full array, so the (8,128) rule is satisfied).
    return pl.pallas_call(
        _model_kernel,
        out_shape=jax.ShapeDtypeStruct((OUT_ROWS, OUT_COLS), jnp.float32),
    )(x1, x2, _SEL)


def _reference(x1, x2):
    # Plain-JAX reference of the same (zero-padded) semantics.
    v = x1 @ x2
    c1 = jnp.concatenate([v, v, v], axis=1)
    c2 = jnp.concatenate([v, v], axis=1)
    pad = lambda a: jnp.pad(a, ((0, 0), (0, OUT_COLS - a.shape[1])))
    return jnp.concatenate(
        [pad(c1), pad(c2), pad(v), pad(v), pad(v), pad(c1), pad(c2)], axis=0)


if __name__ == "__main__":
    key = jax.random.PRNGKey(0)
    k1, k2 = jax.random.split(key)
    x1 = jax.random.normal(k1, (M, K), dtype=jnp.float32)
    x2 = jax.random.normal(k2, (K, N), dtype=jnp.float32)

    out = model_forward(x1, x2)
    out = jax.block_until_ready(out)

    ref = jax.block_until_ready(_reference(x1, x2))
    assert out.shape == (OUT_ROWS, OUT_COLS) and out.dtype == jnp.float32
    np.testing.assert_allclose(np.asarray(out), np.asarray(ref),
                               rtol=1e-5, atol=1e-5)
    print("KERNEL_OK")
</pallas_src>

<mosaic_0001>
module attributes {stable_mosaic.version = 11 : i64} {
  func.func @_model_kernel(%arg0: memref<2x2xf32, #tpu.memory_space<vmem>>, %arg1: memref<2x2xf32, #tpu.memory_space<vmem>>, %arg2: memref<4x14x6xf32, #tpu.memory_space<vmem>>, %arg3: memref<14x6xf32, #tpu.memory_space<vmem>>) attributes {dimension_semantics = [], scalar_prefetch = 0 : i64, scratch_operands = 0 : i64, tpu.core_type = #tpu.core_type<tc>} {
    %c0 = arith.constant 0 : index
    %c0_0 = arith.constant 0 : index
    %0 = vector.load %arg0[%c0, %c0_0] : memref<2x2xf32, #tpu.memory_space<vmem>>, vector<2x2xf32>
    %c0_1 = arith.constant 0 : index
    %c0_2 = arith.constant 0 : index
    %1 = vector.load %arg1[%c0_1, %c0_2] : memref<2x2xf32, #tpu.memory_space<vmem>>, vector<2x2xf32>
    %2 = vector.extract_strided_slice %0 {offsets = [0, 0], sizes = [2, 1], strides = [1, 1]} : vector<2x2xf32> to vector<2x1xf32>
    %3 = vector.extract_strided_slice %1 {offsets = [0, 0], sizes = [1, 2], strides = [1, 1]} : vector<2x2xf32> to vector<1x2xf32>
    %4 = vector.broadcast %2 : vector<2x1xf32> to vector<2x2xf32>
    %5 = vector.broadcast %3 : vector<1x2xf32> to vector<2x2xf32>
    %6 = arith.mulf %4, %5 : vector<2x2xf32>
    %7 = vector.extract_strided_slice %0 {offsets = [0, 1], sizes = [2, 1], strides = [1, 1]} : vector<2x2xf32> to vector<2x1xf32>
    %8 = vector.extract_strided_slice %1 {offsets = [1, 0], sizes = [1, 2], strides = [1, 1]} : vector<2x2xf32> to vector<1x2xf32>
    %9 = vector.broadcast %7 : vector<2x1xf32> to vector<2x2xf32>
    %10 = vector.broadcast %8 : vector<1x2xf32> to vector<2x2xf32>
    %11 = arith.mulf %9, %10 : vector<2x2xf32>
    %12 = arith.addf %6, %11 : vector<2x2xf32>
    %13 = vector.extract_strided_slice %12 {offsets = [0, 0], sizes = [1, 1], strides = [1, 1]} : vector<2x2xf32> to vector<1x1xf32>
    %c0_3 = arith.constant 0 : index
    %c0_4 = arith.constant 0 : index
    %c0_5 = arith.constant 0 : index
    %14 = vector.load %arg2[%c0_3, %c0_4, %c0_5] : memref<4x14x6xf32, #tpu.memory_space<vmem>>, vector<1x14x6xf32>
    %15 = vector.shape_cast %14 : vector<1x14x6xf32> to vector<14x6xf32>
    %16 = vector.broadcast %13 : vector<1x1xf32> to vector<14x6xf32>
    %17 = arith.mulf %16, %15 : vector<14x6xf32>
    %18 = vector.extract_strided_slice %12 {offsets = [0, 1], sizes = [1, 1], strides = [1, 1]} : vector<2x2xf32> to vector<1x1xf32>
    %c1 = arith.constant 1 : index
    %c0_6 = arith.constant 0 : index
    %c0_7 = arith.constant 0 : index
    %19 = vector.load %arg2[%c1, %c0_6, %c0_7] : memref<4x14x6xf32, #tpu.memory_space<vmem>>, vector<1x14x6xf32>
    %20 = vector.shape_cast %19 : vector<1x14x6xf32> to vector<14x6xf32>
    %21 = vector.broadcast %18 : vector<1x1xf32> to vector<14x6xf32>
    %22 = arith.mulf %21, %20 : vector<14x6xf32>
    %23 = arith.addf %17, %22 : vector<14x6xf32>
    %24 = vector.extract_strided_slice %12 {offsets = [1, 0], sizes = [1, 1], strides = [1, 1]} : vector<2x2xf32> to vector<1x1xf32>
    %c2 = arith.constant 2 : index
    %c0_8 = arith.constant 0 : index
    %c0_9 = arith.constant 0 : index
    %25 = vector.load %arg2[%c2, %c0_8, %c0_9] : memref<4x14x6xf32, #tpu.memory_space<vmem>>, vector<1x14x6xf32>
    %26 = vector.shape_cast %25 : vector<1x14x6xf32> to vector<14x6xf32>
    %27 = vector.broadcast %24 : vector<1x1xf32> to vector<14x6xf32>
    %28 = arith.mulf %27, %26 : vector<14x6xf32>
    %29 = arith.addf %23, %28 : vector<14x6xf32>
    %30 = vector.extract_strided_slice %12 {offsets = [1, 1], sizes = [1, 1], strides = [1, 1]} : vector<2x2xf32> to vector<1x1xf32>
    %c3 = arith.constant 3 : index
    %c0_10 = arith.constant 0 : index
    %c0_11 = arith.constant 0 : index
    %31 = vector.load %arg2[%c3, %c0_10, %c0_11] : memref<4x14x6xf32, #tpu.memory_space<vmem>>, vector<1x14x6xf32>
    %32 = vector.shape_cast %31 : vector<1x14x6xf32> to vector<14x6xf32>
    %33 = vector.broadcast %30 : vector<1x1xf32> to vector<14x6xf32>
    %34 = arith.mulf %33, %32 : vector<14x6xf32>
    %35 = arith.addf %29, %34 : vector<14x6xf32>
    %c0_12 = arith.constant 0 : index
    %c0_13 = arith.constant 0 : index
    %36 = vector.load %arg3[%c0_12, %c0_13] : memref<14x6xf32, #tpu.memory_space<vmem>>, vector<14x6xf32>
    tpu.vector_store %arg3[%c0_12, %c0_13], %35 {strides = array<i32>} : memref<14x6xf32, #tpu.memory_space<vmem>>, vector<14x6xf32>,
    return
  }
}

</mosaic_0001>

<llo_original>
// kernel: tpu_custom_call.1
$region0: #{tpu_custom_call.1}
  #allocation0 [shape = 'u32[]', space=smem, size = 0x4, offset = 0x4, fixed_abs, tag = 'smem constant byte address 0x4 - core index']
  #allocation1 [shape = 'u32[144,128]{1,0:T(1,128)}', space=vmem, size = 0x12000, scoped, tag = 'internal scratch']
  %s0 = inlined_call_operand.vmem [shape: f32[2,2], index: 0, kind: input, shape index: {}]
  %s1 = inlined_call_operand.vmem [shape: f32[2,2], index: 1, kind: input, shape index: {}]
  %s2 = inlined_call_operand.vmem [shape: f32[4,14,6], index: 2, kind: input, shape index: {}]
  %s3 = inlined_call_operand.vmem [shape: f32[14,6], index: 3, kind: output, shape index: {}]
  %s4 = sld [smem:[#allocation0]]
  $region22: #{tpu_custom_call.1} parent=0
    _
  %s6 = ssub.s32 1, %s4
  %s7 = scalar_select 0, %s6, %s4
  // Predicated region
  $region2: #{tpu_custom_call.1} parent=0 // pred_check
    _
  $region3: #{tpu_custom_call.1} parent=0 // pred_check_branch
    %9 = sbr.rel (0) target = $region5
  $region4: #{tpu_custom_call.1} parent=0 // pred_region
    _
  $region5: #{tpu_custom_call.1} parent=0 // pred_fallthru
    _
  // Predicated region
  $region6: #{tpu_custom_call.1} parent=0 // pred_check
    _
  $region7: #{tpu_custom_call.1} parent=0 // pred_check_branch
    %11 = sbr.rel (0) target = $region9
  $region8: #{tpu_custom_call.1} parent=0 // pred_region
    _
  $region9: #{tpu_custom_call.1} parent=0 // pred_fallthru
    _
  // Predicated region
  $region10: #{tpu_custom_call.1} parent=0 // pred_check
    _
  $region11: #{tpu_custom_call.1} parent=0 // pred_check_branch
    %13 = sbr.rel (0) target = $region13
  $region12: #{tpu_custom_call.1} parent=0 // pred_region
    _
  $region13: #{tpu_custom_call.1} parent=0 // pred_fallthru
    _
  %v14 = vld [vmem:[%s0] sm:$0x3]
  %v15 = vld [vmem:[%s1] sm:$0x3]
  %17 = vset.pattern.permute.xlu0 0
  %18 = vperm.xlu0 %17, %v14
  %v19 = vpop.permute.xlu0 %18
  %v21 = vlaneseq
  %v22 = vshrl.u32 %v21, 7
  %v23 = vsub.s32 0, %v22
  %v24 = vrot.slane %v15, %v23
  %v25 = vmul.f32 %v19, %v24
  %26 = vset.pattern.permute.xlu0 1
  %27 = vperm.xlu0 %26, %v14
  %v28 = vpop.permute.xlu0 %27
  %v30 = vlaneseq
  %v31 = vshrl.u32 %v30, 7
  %v32 = vsub.s32 1, %v31
  %v33 = vrot.slane %v15, %v32
  %v34 = vmul.f32 %v28, %v33
  %v35 = vadd.f32 %v25, %v34
  %v36 = vld [vmem:[%s2] sm:$0xff]
  %v37 = vld [vmem:[%s2 + $0x8] sm:$0x3f]
  %s39 = vtos %v35
  %v40 = vstv %s39
  %v42 = vmul.f32 %v40, %v36
  %v43 = vmul.f32 %v40, %v37
  %s44 = scalar_lea.vmem %s2, 16
  %v45 = vld [vmem:[%s44] sm:$0xff]
  %v46 = vld [vmem:[%s44 + $0x8] sm:$0x3f]
  %47 = vrot.lane.b32.xlu0 %v35, 127
  %v48 = vpop.permute.xlu0 %47
  %s49 = vtos %v48
  %v50 = vstv %s49
  %v52 = vmul.f32 %v50, %v45
  %v53 = vmul.f32 %v50, %v46
  %v54 = vadd.f32 %v42, %v52
  %v55 = vadd.f32 %v43, %v53
  %s56 = scalar_lea.vmem %s2, 32
  %v57 = vld [vmem:[%s56] sm:$0xff]
  %v58 = vld [vmem:[%s56 + $0x8] sm:$0x3f]
  %v59 = vrot.slane %v35, 1
  %s60 = vtos %v59
  %v61 = vstv %s60
  %v63 = vmul.f32 %v61, %v57
  %v64 = vmul.f32 %v61, %v58
  %v65 = vadd.f32 %v54, %v63
  %v66 = vadd.f32 %v55, %v64
  %s67 = scalar_lea.vmem %s2, 48
  %v68 = vld [vmem:[%s67] sm:$0xff]
  %v69 = vld [vmem:[%s67 + $0x8] sm:$0x3f]
  %70 = vrot.lane.b32.xlu0 %v59, 127
  %v71 = vpop.permute.xlu0 %70
  %s72 = vtos %v71
  %v73 = vstv %s72
  %v75 = vmul.f32 %v73, %v68
  %v76 = vmul.f32 %v73, %v69
  %v77 = vadd.f32 %v65, %v75
  %v78 = vadd.f32 %v66, %v76
  %vm79 = vcmask 48128
  %80 = vst.msk [vmem:[%s3] sm:$0xff] %vm79, %v77
  %vm81 = vcmask 46080
  %82 = vst.msk [vmem:[%s3 + $0x8] sm:$0x3f] %vm81, %v78
  // Predicated region
  $region14: #{tpu_custom_call.1} parent=0 // pred_check
    _
  $region15: #{tpu_custom_call.1} parent=0 // pred_check_branch
    %84 = sbr.rel (0) target = $region17
  $region16: #{tpu_custom_call.1} parent=0 // pred_region
    _
  $region17: #{tpu_custom_call.1} parent=0 // pred_fallthru
    _
  // Predicated region
  $region18: #{tpu_custom_call.1} parent=0 // pred_check
    _
  $region19: #{tpu_custom_call.1} parent=0 // pred_check_branch
    %86 = sbr.rel (0) target = $region21
  $region20: #{tpu_custom_call.1} parent=0 // pred_region
    _
  $region21: #{tpu_custom_call.1} parent=0 // pred_fallthru
    _

</llo_original>
